<compile_context>
chip_gen: v5e
topology: v5e:2x2
jax: 0.10.0
libtpu: 0.0.40
codegen_flags: <defaults>
</compile_context>

<pallas_src>
import math

import jax
import jax.numpy as jnp
from jax.experimental import pallas as pl
from jax.experimental.pallas import tpu as pltpu


_LANE = 256          # lane width: multiple of 128 -> unmasked, lane-dense stores
_HALF = _LANE // 2   # one (u1, u2) pair feeds two outputs (cos half, sin half)
_TILE_ROWS = 512     # 512*256*4B = 512 KiB per f32 block; double-buffered in+out
                     # (+uniform halves) stays well under every gen's scoped VMEM


def _round_up(x, m):
    return ((x + m - 1) // m) * m


def _cos_sin_2pi(u):
    """cos(2*pi*u), sin(2*pi*u) for u in [0, 1).

    Quadrant reduction + short odd/even polynomials: only mul/add/floor/select,
    so it lowers on both Mosaic and the interpret fallback (no trig ops)."""
    w = u * jnp.float32(4.0)                      # [0, 4): quadrant + fraction
    f = w - jnp.floor(w)                          # [0, 1) inside the quadrant
    a = f * jnp.float32(jnp.pi / 2.0)             # [0, pi/2)
    a2 = a * a
    s = a * (1.0 + a2 * (-1.0 / 6.0 + a2 * (1.0 / 120.0
             + a2 * (-1.0 / 5040.0 + a2 * (1.0 / 362880.0)))))
    c = 1.0 + a2 * (-0.5 + a2 * (1.0 / 24.0
             + a2 * (-1.0 / 720.0 + a2 * (1.0 / 40320.0))))
    cos_t = jnp.where(w < 1.0, c, jnp.where(w < 2.0, -s, jnp.where(w < 3.0, -c, s)))
    sin_t = jnp.where(w < 1.0, s, jnp.where(w < 2.0, c, jnp.where(w < 3.0, -s, -c)))
    return cos_t, sin_t


def _box_muller_noise(u1, u2, stddev):
    """Both Box-Muller branches: one (u1, u2) pair -> two N(0, stddev^2) samples.

    u1 in (0, 1], u2 in [0, 1).  stddev is folded into the radius, which saves a
    per-element multiply.  Returns the (tm, 2*half) noise tile."""
    r = jnp.sqrt(jnp.float32(-2.0) * (stddev * stddev) * jnp.log(u1))
    cos_t, sin_t = _cos_sin_2pi(u2)
    return jnp.concatenate([r * cos_t, r * sin_t], axis=-1)


# --- fallback path: uniforms generated on the host (CPU / interpret lowering) ---
def _gaussian_noise_kernel_host_bits(std_ref, u1_ref, u2_ref, x_ref, o_ref):
    o_ref[...] = x_ref[...] + _box_muller_noise(
        u1_ref[...], u2_ref[...], std_ref[0])


# --- TPU path: on-chip hardware PRNG, no extra HBM traffic for randomness ---
def _bits_to_unit_float(bits):
    """Raw 32-bit randomness -> f32 uniformly spaced in [1, 2) (mantissa trick)."""
    u = pltpu.bitcast(bits, jnp.uint32)
    fbits = jnp.bitwise_or(jnp.right_shift(u, jnp.uint32(9)),
                           jnp.uint32(0x3F800000))
    return pltpu.bitcast(fbits, jnp.float32)


def _gaussian_noise_kernel_hw_prng(seed_ref, std_ref, x_ref, o_ref):
    # Re-seed per tile so every grid step (and each megacore half under the
    # "parallel" grid axis) draws independent noise.
    pltpu.prng_seed(seed_ref[0], pl.program_id(0))
    tm, lane = x_ref.shape
    f1 = _bits_to_unit_float(pltpu.prng_random_bits((tm, lane // 2)))
    f2 = _bits_to_unit_float(pltpu.prng_random_bits((tm, lane // 2)))
    u1 = jnp.float32(2.0) - f1   # (0, 1]  -> safe for log
    u2 = f2 - jnp.float32(1.0)   # [0, 1)
    o_ref[...] = x_ref[...] + _box_muller_noise(u1, u2, std_ref[0])


def gaussian_noise(img, key, stddev, *, tile_rows=_TILE_ROWS):
    """Pallas implementation of GaussianNoise.forward: img + N(0, stddev^2)."""
    orig_shape = img.shape
    orig_dtype = img.dtype
    total = math.prod(orig_shape)

    # Lane-dense layout: flatten to (rows, 256) and pad to a whole number of
    # (tile_rows, 256) tiles.  Works for any NCHW shape (e.g. 224x224).
    rows = pl.cdiv(total, _LANE)
    tm = min(tile_rows, _round_up(rows, 8))
    rows_p = _round_up(rows, tm)
    grid_n = rows_p // tm

    x_flat = img.reshape(-1).astype(jnp.float32)
    pad = rows_p * _LANE - total
    if pad:
        x_flat = jnp.pad(x_flat, (0, pad))
    x2d = x_flat.reshape(rows_p, _LANE)

    std_arr = jnp.asarray([stddev], dtype=jnp.float32)

    row_spec = pl.BlockSpec((tm, _LANE), lambda i: (i, 0))
    half_spec = pl.BlockSpec((tm, _HALF), lambda i: (i, 0))
    smem_spec = pl.BlockSpec(memory_space=pltpu.MemorySpace.SMEM)
    cparams = pltpu.CompilerParams(dimension_semantics=("parallel",))
    out_shape = jax.ShapeDtypeStruct((rows_p, _LANE), jnp.float32)

    if jax.default_backend() == "tpu":
        # On-chip hardware PRNG: bits never touch HBM.
        seed = jax.random.randint(key, (1,), 0, 2**31 - 1, dtype=jnp.int32)
        out2d = pl.pallas_call(
            _gaussian_noise_kernel_hw_prng,
            out_shape=out_shape,
            grid=(grid_n,),
            in_specs=[smem_spec, smem_spec, row_spec],
            out_specs=row_spec,
            compiler_params=cparams,
        )(seed, std_arr, x2d)
    else:
        # TODO(synk): pltpu.prng_seed / prng_random_bits have no CPU/interpret
        # lowering, so on non-TPU backends the uniform randomness is generated
        # on the host; the Box-Muller transform + add still run in the kernel.
        k1, k2 = jax.random.split(key)
        u1 = 1.0 - jax.random.uniform(k1, (rows_p, _HALF), dtype=jnp.float32)  # (0,1]
        u2 = jax.random.uniform(k2, (rows_p, _HALF), dtype=jnp.float32)        # [0,1)
        out2d = pl.pallas_call(
            _gaussian_noise_kernel_host_bits,
            out_shape=out_shape,
            grid=(grid_n,),
            in_specs=[smem_spec, half_spec, half_spec, row_spec],
            out_specs=row_spec,
            compiler_params=cparams,
        )(std_arr, u1, u2, x2d)

    out = out2d.reshape(-1)
    if pad:
        out = out[:total]
    return out.reshape(orig_shape).astype(orig_dtype)


if __name__ == "__main__":
    key = jax.random.PRNGKey(0)
    img_key, noise_key = jax.random.split(key)

    # Small NCHW shape consistent with an image-transform module.
    img = jax.random.normal(img_key, (2, 4, 16, 16), dtype=jnp.float32)
    stddev = 0.1

    out = gaussian_noise(img, noise_key, stddev)
    out = jax.block_until_ready(out)

    # Sanity: shape/dtype preserved; noise is ~N(0, stddev^2).
    assert out.shape == img.shape
    assert out.dtype == img.dtype
    noise = out - img
    noise_std = float(jnp.std(noise))
    noise_mean = float(jnp.mean(noise))
    assert 0.05 < noise_std < 0.2, f"unexpected noise std {noise_std}"
    assert abs(noise_mean) < 0.02, f"unexpected noise mean {noise_mean}"

    print("KERNEL_OK")
</pallas_src>

<mosaic_0001>
module attributes {stable_mosaic.version = 11 : i64} {
  func.func @_gaussian_noise_kernel_host_bits(%arg0: i32, %arg1: memref<1xf32, #tpu.memory_space<smem>>, %arg2: memref<8x128xf32, #tpu.memory_space<vmem>>, %arg3: memref<8x128xf32, #tpu.memory_space<vmem>>, %arg4: memref<8x256xf32, #tpu.memory_space<vmem>>, %arg5: memref<8x256xf32, #tpu.memory_space<vmem>>) attributes {dimension_semantics = [#tpu.dimension_semantics<parallel>], iteration_bounds = array<i64: 1>, scalar_prefetch = 0 : i64, scratch_operands = 0 : i64, tpu.core_type = #tpu.core_type<tc>, window_params = [{transform_indices = @transform_0, window_bounds = array<i64: 1>}, {transform_indices = @transform_1, window_bounds = array<i64: 8, 128>}, {transform_indices = @transform_2, window_bounds = array<i64: 8, 128>}, {transform_indices = @transform_3, window_bounds = array<i64: 8, 256>}, {transform_indices = @transform_4, window_bounds = array<i64: 8, 256>}]} {
    %c0 = arith.constant 0 : index
    %c0_0 = arith.constant 0 : index
    %0 = vector.load %arg4[%c0, %c0_0] : memref<8x256xf32, #tpu.memory_space<vmem>>, vector<8x256xf32>
    %c0_1 = arith.constant 0 : index
    %c0_2 = arith.constant 0 : index
    %1 = vector.load %arg2[%c0_1, %c0_2] : memref<8x128xf32, #tpu.memory_space<vmem>>, vector<8x128xf32>
    %c0_3 = arith.constant 0 : index
    %c0_4 = arith.constant 0 : index
    %2 = vector.load %arg3[%c0_3, %c0_4] : memref<8x128xf32, #tpu.memory_space<vmem>>, vector<8x128xf32>
    %c0_5 = arith.constant 0 : index
    %3 = memref.load %arg1[%c0_5] : memref<1xf32, #tpu.memory_space<smem>>
    %4 = arith.mulf %3, %3 : f32
    %cst = arith.constant -2.000000e+00 : f32
    %5 = arith.mulf %cst, %4 : f32
    %6 = math.log %1 : vector<8x128xf32>
    %7 = vector.broadcast %5 : f32 to vector<8x128xf32>
    %8 = arith.mulf %7, %6 : vector<8x128xf32>
    %9 = math.sqrt %8 : vector<8x128xf32>
    %cst_6 = arith.constant 4.000000e+00 : f32
    %10 = vector.broadcast %cst_6 : f32 to vector<8x128xf32>
    %11 = arith.mulf %2, %10 : vector<8x128xf32>
    %12 = math.floor %11 : vector<8x128xf32>
    %13 = arith.subf %11, %12 : vector<8x128xf32>
    %cst_7 = arith.constant 1.57079637 : f32
    %14 = vector.broadcast %cst_7 : f32 to vector<8x128xf32>
    %15 = arith.mulf %13, %14 : vector<8x128xf32>
    %16 = arith.mulf %15, %15 : vector<8x128xf32>
    %cst_8 = arith.constant 2.75573188E-6 : f32
    %17 = vector.broadcast %cst_8 : f32 to vector<8x128xf32>
    %18 = arith.mulf %16, %17 : vector<8x128xf32>
    %cst_9 = arith.constant -1.98412701E-4 : f32
    %19 = vector.broadcast %cst_9 : f32 to vector<8x128xf32>
    %20 = arith.addf %19, %18 : vector<8x128xf32>
    %21 = arith.mulf %16, %20 : vector<8x128xf32>
    %cst_10 = arith.constant 0.00833333377 : f32
    %22 = vector.broadcast %cst_10 : f32 to vector<8x128xf32>
    %23 = arith.addf %22, %21 : vector<8x128xf32>
    %24 = arith.mulf %16, %23 : vector<8x128xf32>
    %cst_11 = arith.constant -0.166666672 : f32
    %25 = vector.broadcast %cst_11 : f32 to vector<8x128xf32>
    %26 = arith.addf %25, %24 : vector<8x128xf32>
    %27 = arith.mulf %16, %26 : vector<8x128xf32>
    %cst_12 = arith.constant 1.000000e+00 : f32
    %28 = vector.broadcast %cst_12 : f32 to vector<8x128xf32>
    %29 = arith.addf %28, %27 : vector<8x128xf32>
    %30 = arith.mulf %15, %29 : vector<8x128xf32>
    %cst_13 = arith.constant 2.48015876E-5 : f32
    %31 = vector.broadcast %cst_13 : f32 to vector<8x128xf32>
    %32 = arith.mulf %16, %31 : vector<8x128xf32>
    %cst_14 = arith.constant -0.00138888892 : f32
    %33 = vector.broadcast %cst_14 : f32 to vector<8x128xf32>
    %34 = arith.addf %33, %32 : vector<8x128xf32>
    %35 = arith.mulf %16, %34 : vector<8x128xf32>
    %cst_15 = arith.constant 0.0416666679 : f32
    %36 = vector.broadcast %cst_15 : f32 to vector<8x128xf32>
    %37 = arith.addf %36, %35 : vector<8x128xf32>
    %38 = arith.mulf %16, %37 : vector<8x128xf32>
    %cst_16 = arith.constant -5.000000e-01 : f32
    %39 = vector.broadcast %cst_16 : f32 to vector<8x128xf32>
    %40 = arith.addf %39, %38 : vector<8x128xf32>
    %41 = arith.mulf %16, %40 : vector<8x128xf32>
    %cst_17 = arith.constant 1.000000e+00 : f32
    %42 = vector.broadcast %cst_17 : f32 to vector<8x128xf32>
    %43 = arith.addf %42, %41 : vector<8x128xf32>
    %cst_18 = arith.constant 1.000000e+00 : f32
    %44 = vector.broadcast %cst_18 : f32 to vector<8x128xf32>
    %45 = arith.cmpf olt, %11, %44 : vector<8x128xf32>
    %cst_19 = arith.constant 2.000000e+00 : f32
    %46 = vector.broadcast %cst_19 : f32 to vector<8x128xf32>
    %47 = arith.cmpf olt, %11, %46 : vector<8x128xf32>
    %cst_20 = arith.constant 0.000000e+00 : f32
    %48 = vector.broadcast %cst_20 : f32 to vector<8x128xf32>
    %49 = arith.subf %48, %30 : vector<8x128xf32>
    %cst_21 = arith.constant 3.000000e+00 : f32
    %50 = vector.broadcast %cst_21 : f32 to vector<8x128xf32>
    %51 = arith.cmpf olt, %11, %50 : vector<8x128xf32>
    %cst_22 = arith.constant 0.000000e+00 : f32
    %52 = vector.broadcast %cst_22 : f32 to vector<8x128xf32>
    %53 = arith.subf %52, %43 : vector<8x128xf32>
    %54 = arith.select %51, %53, %30 : vector<8x128xi1>, vector<8x128xf32>
    %55 = arith.select %47, %49, %54 : vector<8x128xi1>, vector<8x128xf32>
    %56 = arith.select %45, %43, %55 : vector<8x128xi1>, vector<8x128xf32>
    %cst_23 = arith.constant 1.000000e+00 : f32
    %57 = vector.broadcast %cst_23 : f32 to vector<8x128xf32>
    %58 = arith.cmpf olt, %11, %57 : vector<8x128xf32>
    %cst_24 = arith.constant 2.000000e+00 : f32
    %59 = vector.broadcast %cst_24 : f32 to vector<8x128xf32>
    %60 = arith.cmpf olt, %11, %59 : vector<8x128xf32>
    %cst_25 = arith.constant 3.000000e+00 : f32
    %61 = vector.broadcast %cst_25 : f32 to vector<8x128xf32>
    %62 = arith.cmpf olt, %11, %61 : vector<8x128xf32>
    %cst_26 = arith.constant 0.000000e+00 : f32
    %63 = vector.broadcast %cst_26 : f32 to vector<8x128xf32>
    %64 = arith.subf %63, %30 : vector<8x128xf32>
    %cst_27 = arith.constant 0.000000e+00 : f32
    %65 = vector.broadcast %cst_27 : f32 to vector<8x128xf32>
    %66 = arith.subf %65, %43 : vector<8x128xf32>
    %67 = arith.select %62, %64, %66 : vector<8x128xi1>, vector<8x128xf32>
    %68 = arith.select %60, %43, %67 : vector<8x128xi1>, vector<8x128xf32>
    %69 = arith.select %58, %30, %68 : vector<8x128xi1>, vector<8x128xf32>
    %70 = arith.mulf %9, %56 : vector<8x128xf32>
    %71 = arith.mulf %9, %69 : vector<8x128xf32>
    %72 = tpu.concatenate %70, %71 in 1 : vector<8x128xf32>, vector<8x128xf32> -> vector<8x256xf32>
    %73 = arith.addf %0, %72 : vector<8x256xf32>
    %c0_28 = arith.constant 0 : index
    %c0_29 = arith.constant 0 : index
    %74 = vector.load %arg5[%c0_28, %c0_29] : memref<8x256xf32, #tpu.memory_space<vmem>>, vector<8x256xf32>
    tpu.vector_store %arg5[%c0_28, %c0_29], %73 {strides = array<i32>} : memref<8x256xf32, #tpu.memory_space<vmem>>, vector<8x256xf32>,
    return
  }
  func.func @transform_0(%arg0: i32) -> i32 {
    %c0_i32 = arith.constant 0 : i32
    %c0_i32_0 = arith.constant 0 : i32
    return %c0_i32 : i32
  }
  func.func @transform_1(%arg0: i32) -> (i32, i32) {
    %c0_i32 = arith.constant 0 : i32
    %c0_i32_0 = arith.constant 0 : i32
    return %arg0, %c0_i32 : i32, i32
  }
  func.func @transform_2(%arg0: i32) -> (i32, i32) {
    %c0_i32 = arith.constant 0 : i32
    %c0_i32_0 = arith.constant 0 : i32
    return %arg0, %c0_i32 : i32, i32
  }
  func.func @transform_3(%arg0: i32) -> (i32, i32) {
    %c0_i32 = arith.constant 0 : i32
    %c0_i32_0 = arith.constant 0 : i32
    return %arg0, %c0_i32 : i32, i32
  }
  func.func @transform_4(%arg0: i32) -> (i32, i32) {
    %c0_i32 = arith.constant 0 : i32
    %c0_i32_0 = arith.constant 0 : i32
    return %arg0, %c0_i32 : i32, i32
  }
}

</mosaic_0001>

<llo_original>
// kernel: tpu_custom_call.1
$region0: #{tpu_custom_call.1}
  #allocation0 [shape = 'u32[]', space=smem, size = 0x4, offset = 0x4, fixed_abs, tag = 'smem constant byte address 0x4 - core index']
  #allocation1 [shape = 'u32[72,128]{1,0:T(1,128)}', space=vmem, size = 0x9000, scoped, tag = 'internal scratch']
  #allocation2 [shape = 'f32[1]{0:T(128)S(6)}', space=smem, size = 0x200, scoped, tag = 'scoped memory for tpu_custom_call.1']
  %s0 = inlined_call_operand.<no memory space> [shape: f32[1], index: 0, kind: input, shape index: {}]
  %s1 = inlined_call_operand.hbm [shape: f32[8,128], index: 1, kind: input, shape index: {}]
  %s2 = inlined_call_operand.hbm [shape: f32[8,128], index: 2, kind: input, shape index: {}]
  %s3 = inlined_call_operand.hbm [shape: f32[8,256], index: 3, kind: input, shape index: {}]
  %s4 = inlined_call_operand.hbm [shape: f32[8,256], index: 4, kind: output, shape index: {}]
  %s5 = sld [smem:[#allocation0]]
  $region38: #{tpu_custom_call.1} parent=0
    _
  %s7 = ssub.s32 1, %s5
  %s8 = scalar_select 0, %s7, %s5
  %9 = sst [smem:[#allocation2]] %s0
  $region1: #{tpu_custom_call.1} parent=0
    #allocation3 [shape = 'u8[4096]{0}', space=vmem, size = 0x1000, scoped, tag = 'input window, operand 1, single buffered']
    #allocation4 [shape = 's32[1]{0}', space=sflag, size = 0x4, scoped, tag = 'scoped memory for tpu_custom_call.1']
    #allocation5 [shape = 's32[1]{0}', space=sflag, size = 0x4, scoped, tag = 'scoped memory for tpu_custom_call.1']
    #allocation6 [shape = 'u8[4096]{0}', space=vmem, size = 0x1000, scoped, tag = 'input window, operand 2, single buffered']
    #allocation7 [shape = 's32[1]{0}', space=sflag, size = 0x4, scoped, tag = 'scoped memory for tpu_custom_call.1']
    #allocation8 [shape = 'u8[8192]{0}', space=vmem, size = 0x2000, scoped, tag = 'input window, operand 3, single buffered']
    #allocation9 [shape = 'u8[8192]{0}', space=vmem, size = 0x2000, scoped, tag = 'output window, operand 0, single buffered']
    %10 = vsyncpa [#allocation4], 0
    %11 = vsyncpa [#allocation7], 0
    %12 = vsyncpa [#allocation5], 0
    // Predicated region
    $region2: #{tpu_custom_call.1} parent=1 // pred_check
      _
    $region3: #{tpu_custom_call.1} parent=1 // pred_check_branch
      %14 = sbr.rel (0) target = $region5
    $region4: #{tpu_custom_call.1} parent=1 // pred_region
      _
    $region5: #{tpu_custom_call.1} parent=1 // pred_fallthru
      _
    // Predicated region
    $region6: #{tpu_custom_call.1} parent=1 // pred_check
      _
    $region7: #{tpu_custom_call.1} parent=1 // pred_check_branch
      %16 = sbr.rel (0) target = $region9
    $region8: #{tpu_custom_call.1} parent=1 // pred_region
      %18 = vsyncadd [#allocation4], 0
      %s20 = sshll.u32 %s1, 4
      %s21 = int_to_ptr.hbm [resolvable:$true] %s20
      %s22 = sshll.u32 [#allocation3], 4
      %s23 = int_to_ptr.vmem [resolvable:$true] %s22
      %25 = dma.hbm_to_vmem [thread:$0]  %s21, 128, %s23, [#allocation4]
    $region9: #{tpu_custom_call.1} parent=1 // pred_fallthru
      _
    // Predicated region
    $region10: #{tpu_custom_call.1} parent=1 // pred_check
      _
    $region11: #{tpu_custom_call.1} parent=1 // pred_check_branch
      %27 = sbr.rel (0) target = $region13
    $region12: #{tpu_custom_call.1} parent=1 // pred_region
      %29 = vsyncadd [#allocation7], 0
      %s31 = sshll.u32 %s2, 4
      %s32 = int_to_ptr.hbm [resolvable:$true] %s31
      %s33 = sshll.u32 [#allocation6], 4
      %s34 = int_to_ptr.vmem [resolvable:$true] %s33
      %36 = dma.hbm_to_vmem [thread:$0]  %s32, 128, %s34, [#allocation7]
    $region13: #{tpu_custom_call.1} parent=1 // pred_fallthru
      _
    // Predicated region
    $region14: #{tpu_custom_call.1} parent=1 // pred_check
      _
    $region15: #{tpu_custom_call.1} parent=1 // pred_check_branch
      %38 = sbr.rel (0) target = $region17
    $region16: #{tpu_custom_call.1} parent=1 // pred_region
      %40 = vsyncadd [#allocation7], 0
      %s42 = sshll.u32 %s3, 4
      %s43 = int_to_ptr.hbm [resolvable:$true] %s42
      %s44 = sshll.u32 [#allocation8], 4
      %s45 = int_to_ptr.vmem [resolvable:$true] %s44
      %47 = dma.hbm_to_vmem [thread:$0]  %s43, 256, %s45, [#allocation7]
    $region17: #{tpu_custom_call.1} parent=1 // pred_fallthru
      _
    // Predicated region
    $region18: #{tpu_custom_call.1} parent=1 // pred_check
      _
    $region19: #{tpu_custom_call.1} parent=1 // pred_check_branch
      %49 = sbr.rel (0) target = $region21
    $region20: #{tpu_custom_call.1} parent=1 // pred_region
      %51 = dma.done [#allocation4], 128
    $region21: #{tpu_custom_call.1} parent=1 // pred_fallthru
      _
    // Predicated region
    $region22: #{tpu_custom_call.1} parent=1 // pred_check
      _
    $region23: #{tpu_custom_call.1} parent=1 // pred_check_branch
      %53 = sbr.rel (0) target = $region25
    $region24: #{tpu_custom_call.1} parent=1 // pred_region
      %55 = dma.done [#allocation7], 128
    $region25: #{tpu_custom_call.1} parent=1 // pred_fallthru
      _
    // Predicated region
    $region26: #{tpu_custom_call.1} parent=1 // pred_check
      _
    $region27: #{tpu_custom_call.1} parent=1 // pred_check_branch
      %57 = sbr.rel (0) target = $region29
    $region28: #{tpu_custom_call.1} parent=1 // pred_region
      %59 = dma.done [#allocation7], 256
    $region29: #{tpu_custom_call.1} parent=1 // pred_fallthru
      _
    %v60 = vld [vmem:[#allocation8] sm:$0xff]
    %v61 = vld [vmem:[#allocation8 + $0x8] sm:$0xff]
    %v62 = vld [vmem:[#allocation3] sm:$0xff]
    %v63 = vld [vmem:[#allocation6] sm:$0xff]
    %s64 = sld [smem:[#allocation2]]
    %s65 = smul.f32 %s64, %s64
    %s66 = smul.f32 %s65, -2.0
    %v67 = vlog2.pop %v62
    %v68 = vmul.f32 %v67, 0.6931472
    %v69 = vstv %s66
    %v70 = vmul.f32 %v69, %v68
    %v71 = vrsqrt.pop %v70
    %v72 = vmul.f32 %v71, %v70
    %v73 = vmul.f32 %v72, %v71
    %v74 = vmul.f32 0.5, %v73
    %v75 = vsub.f32 1.5, %v74
    %v76 = vmul.f32 %v71, %v75
    %v77 = vmul.f32 %v70, %v76
    %vm78 = vcmp.eq.f32.partialorder %v70, inf
    %v79 = vsel %vm78, %v70, %v77
    %vm80 = vcmp.eq.f32.partialorder %v70, 0.0
    %v81 = vand.u32 %v70, 2147483648
    %v82 = vsel %vm80, %v81, %v79
    %v83 = vmul.f32 %v63, 4.0
    %v84 = vfloor.f32 %v83
    %v85 = vsub.f32 %v83, %v84
    %v86 = vmul.f32 %v85, 1.5707964
    %v87 = vmul.f32 %v86, %v86
    %v88 = vmul.f32 %v87, 2.7557319e-06
    %v89 = vadd.f32 %v88, -0.0001984127
    %v90 = vmul.f32 %v87, %v89
    %v91 = vadd.f32 %v90, 0.008333334
    %v92 = vmul.f32 %v87, %v91
    %v93 = vadd.f32 %v92, -0.16666667
    %v94 = vmul.f32 %v87, %v93
    %v95 = vadd.f32 %v94, 1.0
    %v96 = vmul.f32 %v86, %v95
    %v97 = vmul.f32 %v87, 2.4801588e-05
    %v98 = vadd.f32 %v97, -0.0013888889
    %v99 = vmul.f32 %v87, %v98
    %v100 = vadd.f32 %v99, 0.041666668
    %v101 = vmul.f32 %v87, %v100
    %v102 = vadd.f32 %v101, -0.5
    %v103 = vmul.f32 %v87, %v102
    %v104 = vadd.f32 %v103, 1.0
    %vm105 = vcmp.lt.f32.partialorder %v83, 1.0
    %vm106 = vcmp.lt.f32.partialorder %v83, 2.0
    %v107 = vsub.f32 0.0, %v96
    %vm108 = vcmp.lt.f32.partialorder %v83, 3.0
    %v109 = vsub.f32 0.0, %v104
    %v110 = vsel %vm108, %v109, %v96
    %v111 = vsel %vm106, %v107, %v110
    %v112 = vsel %vm105, %v104, %v111
    %v113 = vsel %vm108, %v107, %v109
    %v114 = vsel %vm106, %v104, %v113
    %v115 = vsel %vm105, %v96, %v114
    %v116 = vmul.f32 %v82, %v112
    %v117 = vmul.f32 %v82, %v115
    %v118 = vadd.f32 %v60, %v116
    %v119 = vadd.f32 %v61, %v117
    %120 = vst [vmem:[#allocation9] sm:$0xff] %v118
    %121 = vst [vmem:[#allocation9 + $0x8] sm:$0xff] %v119
    // Predicated region
    $region30: #{tpu_custom_call.1} parent=1 // pred_check
      _
    $region31: #{tpu_custom_call.1} parent=1 // pred_check_branch
      %123 = sbr.rel (0) target = $region33
    $region32: #{tpu_custom_call.1} parent=1 // pred_region
      %125 = vsyncadd [#allocation5], 0
      %s127 = sshll.u32 [#allocation9], 4
      %s128 = int_to_ptr.vmem [resolvable:$true] %s127
      %s129 = sshll.u32 %s4, 4
      %s130 = int_to_ptr.hbm [resolvable:$true] %s129
      %132 = dma.vmem_to_hbm [thread:$0]  %s128, 256, %s130, [#allocation5]
    $region33: #{tpu_custom_call.1} parent=1 // pred_fallthru
      _
    // Predicated region
    $region34: #{tpu_custom_call.1} parent=1 // pred_check
      _
    $region35: #{tpu_custom_call.1} parent=1 // pred_check_branch
      %134 = sbr.rel (0) target = $region37
    $region36: #{tpu_custom_call.1} parent=1 // pred_region
      %136 = dma.done [#allocation5], 256
    $region37: #{tpu_custom_call.1} parent=1 // pred_fallthru
      _
    %137 = vsyncpa [#allocation4], 1
    %138 = vsyncpa [#allocation7], 1
    %139 = vsyncpa [#allocation5], 1

</llo_original>
